<compile_context>
chip_gen: v6e
topology: v6e:2x2x1
jax: 0.10.0
libtpu: 0.0.40
codegen_flags: <defaults>
</compile_context>

<pallas_src>
import math

import jax
import jax.numpy as jnp
from jax.experimental import pallas as pl
from jax.experimental.pallas import tpu as pltpu


NEG_SLOPE = 0.01   # LeakyReLU default negative slope
LANES = 128        # lane-dense padded feature width for hidden/output


def _leaky_relu(x):
    # max(x, a*x) == LeakyReLU(x) for 0 < a < 1; one mul + one max on the VPU.
    return jnp.maximum(x, NEG_SLOPE * x)


def _round_up(n, m):
    return ((n + m - 1) // m) * m


def _pad2(a, rows, cols):
    """Zero-pad a 2-D array to [rows, cols]."""
    return jnp.zeros((rows, cols), a.dtype).at[: a.shape[0], : a.shape[1]].set(a)


def _pad1(a, cols):
    """Zero-pad a 1-D array to [cols]."""
    return jnp.zeros((cols,), a.dtype).at[: a.shape[0]].set(a)


def mlp_kernel(x_ref, w1_ref, w23_ref, b_ref, o_ref):
    """Fused 3-layer MLP forward on one [tile_m, in_dim] batch tile.

    x_ref:   [tile_m, in_dim]     f32 (unpadded feature dim; Mosaic pads K)
    w1_ref:  [in_dim, 128]        bf16
    w23_ref: [2, 128, 128]        bf16 (layer-2 and layer-3 weights)
    b_ref:   [3, 128]             f32  (all three biases)
    o_ref:   [tile_m, 128]        f32  (lane-dense, unmasked stores)
    """
    b = b_ref[...]                                      # [3, 128] f32

    x = x_ref[...].astype(jnp.bfloat16)                 # [tile_m, in_dim]
    h = jnp.dot(x, w1_ref[...], preferred_element_type=jnp.float32) + b[0:1]
    h = _leaky_relu(h)

    h = jnp.dot(h.astype(jnp.bfloat16), w23_ref[0],
                preferred_element_type=jnp.float32) + b[1:2]
    h = _leaky_relu(h)

    out = jnp.dot(h.astype(jnp.bfloat16), w23_ref[1],
                  preferred_element_type=jnp.float32) + b[2:3]
    o_ref[...] = out.astype(o_ref.dtype)                # full [tile_m, 128] store


def prepare_params(params):
    """One-time (out of the per-forward hot path) padding / packing / casting.

    params: w1 [in,hid], b1 [hid], w2 [hid,hid], b2 [hid], w3 [hid,out], b3 [out]
            (weights stored as [in, out], i.e. PyTorch W.T, so y = x @ W + b).
    """
    in_dim = params["w1"].shape[0]
    out_dim = params["w3"].shape[1]

    w1 = _pad2(params["w1"], in_dim, LANES).astype(jnp.bfloat16)        # [in,128]
    w23 = jnp.stack([
        _pad2(params["w2"], LANES, LANES),
        _pad2(params["w3"], LANES, LANES),
    ]).astype(jnp.bfloat16)                                             # [2,128,128]
    b = jnp.stack([
        _pad1(params["b1"], LANES),
        _pad1(params["b2"], LANES),
        _pad1(params["b3"], LANES),
    ])                                                                  # [3,128] f32
    return {"w1": w1, "w23": w23, "b": b, "in_dim": in_dim, "out_dim": out_dim}


def mlp_forward(x, prepared, *, tile_m=None):
    """Run the fused MLP Pallas kernel. x: [B, in_dim] float32."""
    B, in_dim = x.shape
    assert in_dim == prepared["in_dim"]
    out_dim = prepared["out_dim"]

    if tile_m is None:
        if B >= 512:
            # 2 batch tiles: both v7x TensorCores get work; still only 2 serial
            # grid steps (~0.7 us overhead) on single-TC v5e/v6e.
            tile_m = _round_up(_round_up(B, 2) // 2, 8)
        else:
            tile_m = _round_up(max(B, 8), 8)            # single grid step

    b_pad = _round_up(B, tile_m)
    if b_pad != B:
        x = jnp.zeros((b_pad, in_dim), x.dtype).at[:B].set(x)

    grid = (b_pad // tile_m,)

    out = pl.pallas_call(
        mlp_kernel,
        out_shape=jax.ShapeDtypeStruct((b_pad, LANES), jnp.float32),
        grid=grid,
        in_specs=[
            pl.BlockSpec((tile_m, in_dim), lambda i: (i, 0)),       # x (tiled)
            pl.BlockSpec((in_dim, LANES), lambda i: (0, 0)),        # w1 (resident)
            pl.BlockSpec((2, LANES, LANES), lambda i: (0, 0, 0)),   # w2,w3 (resident)
            pl.BlockSpec((3, LANES), lambda i: (0, 0)),             # biases (resident)
        ],
        out_specs=pl.BlockSpec((tile_m, LANES), lambda i: (i, 0)),
        compiler_params=pltpu.CompilerParams(
            dimension_semantics=("parallel",),   # v7x: shard batch tiles over TCs
        ),
    )(x, prepared["w1"], prepared["w23"], prepared["b"])

    # Strip batch padding and the zero-padded output lanes.
    return out[:B, :out_dim]


def init_params(key, input_dim, hidden_dim, output_dim):
    """Deterministic init mirroring PyTorch nn.Linear default:
    W, b ~ U(-1/sqrt(fan_in), 1/sqrt(fan_in)). Weights stored as [in, out]."""
    dims = [(input_dim, hidden_dim), (hidden_dim, hidden_dim), (hidden_dim, output_dim)]
    params = {}
    for idx, (fan_in, fan_out) in enumerate(dims, start=1):
        key, kw, kb = jax.random.split(key, 3)
        bound = 1.0 / math.sqrt(fan_in)
        params[f"w{idx}"] = jax.random.uniform(
            kw, (fan_in, fan_out), jnp.float32, minval=-bound, maxval=bound)
        params[f"b{idx}"] = jax.random.uniform(
            kb, (fan_out,), jnp.float32, minval=-bound, maxval=bound)
    return params


def mlp_reference(x, params):
    """Pure-JAX f32 reference (matches PyTorch Model.forward semantics)."""
    h = _leaky_relu(x @ params["w1"] + params["b1"])
    h = _leaky_relu(h @ params["w2"] + params["b2"])
    return h @ params["w3"] + params["b3"]


if __name__ == "__main__":
    INPUT_DIM, HIDDEN_DIM, OUTPUT_DIM = 2, 32, 2   # two-moons config, nm_layers=3
    BATCH = 512                                    # 2 batch tiles of 256 rows

    key = jax.random.PRNGKey(0)
    key, kx = jax.random.split(key)
    x = jax.random.normal(kx, (BATCH, INPUT_DIM), jnp.float32)

    params = init_params(key, INPUT_DIM, HIDDEN_DIM, OUTPUT_DIM)
    prepared = prepare_params(params)              # padding/casting hoisted out of hot path

    out = mlp_forward(x, prepared)
    out = jax.block_until_ready(out)

    ref = mlp_reference(x, params)
    assert out.shape == (BATCH, OUTPUT_DIM)
    # bf16 MXU operands -> relaxed tolerance vs the f32 reference.
    assert jnp.allclose(out, ref, atol=5e-2, rtol=5e-2), "Pallas output mismatch vs reference"

    print("KERNEL_OK")
</pallas_src>

<mosaic_0001>
module attributes {stable_mosaic.version = 11 : i64} {
  func.func @mlp_kernel(%arg0: i32, %arg1: memref<256x2xf32, #tpu.memory_space<vmem>>, %arg2: memref<2x128xbf16, #tpu.memory_space<vmem>>, %arg3: memref<2x128x128xbf16, #tpu.memory_space<vmem>>, %arg4: memref<3x128xf32, #tpu.memory_space<vmem>>, %arg5: memref<256x128xf32, #tpu.memory_space<vmem>>) attributes {dimension_semantics = [#tpu.dimension_semantics<parallel>], iteration_bounds = array<i64: 2>, scalar_prefetch = 0 : i64, scratch_operands = 0 : i64, tpu.core_type = #tpu.core_type<tc>, window_params = [{transform_indices = @transform_0, window_bounds = array<i64: 256, 2>}, {pipeline_mode = #tpu.pipeline_mode<synchronous>, transform_indices = @transform_1, window_bounds = array<i64: 2, 128>}, {pipeline_mode = #tpu.pipeline_mode<synchronous>, transform_indices = @transform_2, window_bounds = array<i64: 2, 128, 128>}, {pipeline_mode = #tpu.pipeline_mode<synchronous>, transform_indices = @transform_3, window_bounds = array<i64: 3, 128>}, {transform_indices = @transform_4, window_bounds = array<i64: 256, 128>}]} {
    %c0 = arith.constant 0 : index
    %c0_0 = arith.constant 0 : index
    %0 = vector.load %arg4[%c0, %c0_0] : memref<3x128xf32, #tpu.memory_space<vmem>>, vector<3x128xf32>
    %c0_1 = arith.constant 0 : index
    %c0_2 = arith.constant 0 : index
    %1 = vector.load %arg1[%c0_1, %c0_2] : memref<256x2xf32, #tpu.memory_space<vmem>>, vector<256x2xf32>
    %2 = arith.truncf %1 : vector<256x2xf32> to vector<256x2xbf16>
    %c0_3 = arith.constant 0 : index
    %c0_4 = arith.constant 0 : index
    %3 = vector.load %arg2[%c0_3, %c0_4] : memref<2x128xbf16, #tpu.memory_space<vmem>>, vector<2x128xbf16>
    %cst = arith.constant dense<0.000000e+00> : vector<256x128xf32>
    %4 = tpu.matmul %2, %3, %cst {dimension_numbers = #tpu.dot_dimension_numbers<[1], [0], [0], [1], [0, 0, 1, 1], [], []>} : vector<256x2xbf16>, vector<2x128xbf16>, vector<256x128xf32> -> vector<256x128xf32>
    %5 = vector.extract_strided_slice %0 {offsets = [0, 0], sizes = [1, 128], strides = [1, 1]} : vector<3x128xf32> to vector<1x128xf32>
    %6 = vector.broadcast %5 : vector<1x128xf32> to vector<256x128xf32>
    %7 = arith.addf %4, %6 : vector<256x128xf32>
    %cst_5 = arith.constant 0.00999999977 : f32
    %8 = vector.broadcast %cst_5 : f32 to vector<256x128xf32>
    %9 = arith.mulf %8, %7 : vector<256x128xf32>
    %10 = arith.maximumf %7, %9 : vector<256x128xf32>
    %11 = arith.truncf %10 : vector<256x128xf32> to vector<256x128xbf16>
    %c0_6 = arith.constant 0 : index
    %c0_7 = arith.constant 0 : index
    %c0_8 = arith.constant 0 : index
    %12 = vector.load %arg3[%c0_6, %c0_7, %c0_8] : memref<2x128x128xbf16, #tpu.memory_space<vmem>>, vector<1x128x128xbf16>
    %13 = vector.shape_cast %12 : vector<1x128x128xbf16> to vector<128x128xbf16>
    %cst_9 = arith.constant dense<0.000000e+00> : vector<256x128xf32>
    %14 = tpu.matmul %11, %13, %cst_9 {dimension_numbers = #tpu.dot_dimension_numbers<[1], [0], [0], [1], [0, 0, 1, 1], [], []>} : vector<256x128xbf16>, vector<128x128xbf16>, vector<256x128xf32> -> vector<256x128xf32>
    %15 = vector.extract_strided_slice %0 {offsets = [1, 0], sizes = [1, 128], strides = [1, 1]} : vector<3x128xf32> to vector<1x128xf32>
    %16 = vector.broadcast %15 : vector<1x128xf32> to vector<256x128xf32>
    %17 = arith.addf %14, %16 : vector<256x128xf32>
    %cst_10 = arith.constant 0.00999999977 : f32
    %18 = vector.broadcast %cst_10 : f32 to vector<256x128xf32>
    %19 = arith.mulf %18, %17 : vector<256x128xf32>
    %20 = arith.maximumf %17, %19 : vector<256x128xf32>
    %21 = arith.truncf %20 : vector<256x128xf32> to vector<256x128xbf16>
    %c1 = arith.constant 1 : index
    %c0_11 = arith.constant 0 : index
    %c0_12 = arith.constant 0 : index
    %22 = vector.load %arg3[%c1, %c0_11, %c0_12] : memref<2x128x128xbf16, #tpu.memory_space<vmem>>, vector<1x128x128xbf16>
    %23 = vector.shape_cast %22 : vector<1x128x128xbf16> to vector<128x128xbf16>
    %cst_13 = arith.constant dense<0.000000e+00> : vector<256x128xf32>
    %24 = tpu.matmul %21, %23, %cst_13 {dimension_numbers = #tpu.dot_dimension_numbers<[1], [0], [0], [1], [0, 0, 1, 1], [], []>} : vector<256x128xbf16>, vector<128x128xbf16>, vector<256x128xf32> -> vector<256x128xf32>
    %25 = vector.extract_strided_slice %0 {offsets = [2, 0], sizes = [1, 128], strides = [1, 1]} : vector<3x128xf32> to vector<1x128xf32>
    %26 = vector.broadcast %25 : vector<1x128xf32> to vector<256x128xf32>
    %27 = arith.addf %24, %26 : vector<256x128xf32>
    %c0_14 = arith.constant 0 : index
    %c0_15 = arith.constant 0 : index
    %28 = vector.load %arg5[%c0_14, %c0_15] : memref<256x128xf32, #tpu.memory_space<vmem>>, vector<256x128xf32>
    tpu.vector_store %arg5[%c0_14, %c0_15], %27 {strides = array<i32>} : memref<256x128xf32, #tpu.memory_space<vmem>>, vector<256x128xf32>,
    return
  }
  func.func @transform_0(%arg0: i32) -> (i32, i32) {
    %c0_i32 = arith.constant 0 : i32
    %c0_i32_0 = arith.constant 0 : i32
    return %arg0, %c0_i32 : i32, i32
  }
  func.func @transform_1(%arg0: i32) -> (i32, i32) {
    %c0_i32 = arith.constant 0 : i32
    %c0_i32_0 = arith.constant 0 : i32
    %c0_i32_1 = arith.constant 0 : i32
    return %c0_i32, %c0_i32_0 : i32, i32
  }
  func.func @transform_2(%arg0: i32) -> (i32, i32, i32) {
    %c0_i32 = arith.constant 0 : i32
    %c0_i32_0 = arith.constant 0 : i32
    %c0_i32_1 = arith.constant 0 : i32
    %c0_i32_2 = arith.constant 0 : i32
    return %c0_i32, %c0_i32_0, %c0_i32_1 : i32, i32, i32
  }
  func.func @transform_3(%arg0: i32) -> (i32, i32) {
    %c0_i32 = arith.constant 0 : i32
    %c0_i32_0 = arith.constant 0 : i32
    %c0_i32_1 = arith.constant 0 : i32
    return %c0_i32, %c0_i32_0 : i32, i32
  }
  func.func @transform_4(%arg0: i32) -> (i32, i32) {
    %c0_i32 = arith.constant 0 : i32
    %c0_i32_0 = arith.constant 0 : i32
    return %arg0, %c0_i32 : i32, i32
  }
}

</mosaic_0001>

<llo_original>
// kernel: tpu_custom_call.1
$region0: #{tpu_custom_call.1}
  #allocation0 [shape = 'u32[]', space=smem, size = 0x4, offset = 0x4, fixed_abs, tag = 'smem constant byte address 0x4 - core index']
  #allocation1 [shape = 'u32[144,128]{1,0:T(1,128)}', space=vmem, size = 0x12000, scoped, tag = 'internal scratch']
  %s0 = inlined_call_operand.vmem [shape: f32[512,2], index: 0, kind: input, shape index: {}]
  %s1 = inlined_call_operand.vmem [shape: bf16[2,128], index: 1, kind: input, shape index: {}]
  %s2 = inlined_call_operand.vmem [shape: bf16[2,128,128], index: 2, kind: input, shape index: {}]
  %s3 = inlined_call_operand.vmem [shape: f32[3,128], index: 3, kind: input, shape index: {}]
  %s4 = inlined_call_operand.hbm [shape: f32[512,128], index: 4, kind: output, shape index: {}]
  %s5 = sld [smem:[#allocation0]]
  $region49: #{tpu_custom_call.1} parent=0
    _
  %s7 = ssub.s32 1, %s5
  %s8 = scalar_select 0, %s7, %s5
  $region1: #{tpu_custom_call.1} parent=0
    #allocation2 [shape = 'u8[262144]{0}', space=vmem, size = 0x40000, scoped, tag = 'output window, operand 0']
    #allocation3 [shape = 's32[2]{0}', space=sflag, size = 0x8, scoped, tag = 'scoped memory for tpu_custom_call.1']
    %9 = vsyncpa [#allocation3], 0
    %s10 = scalar_lea.sflag [#allocation3], 1
    %11 = vsyncpa %s10, 0
    loop: start=0, step=1, limit=4
    $region2: #{tpu_custom_call.1} parent=1 // loop_pre_header
      _
    $region3: #{tpu_custom_call.1} parent=1 // loop_header
      %s13 = sphi 0, %s17
      %p14 = scmp.ge.s32.totalorder %s13, 4
      %s23 = sphi 0, %s25
      %s26 = sphi 0, %s23
      %s27 = sphi 0, %s26
      %s43 = sphi 0, %s27
      %s47 = sphi 0, %s47
      %s49 = sphi 0, %s47
      %s50 = sphi 0, %s49
      %s64 = sphi 0, %s50
      %s68 = sphi 0, %s68
      %s70 = sphi 0, %s68
      %s71 = sphi 0, %s70
      %s85 = sphi 0, %s71
      %s89 = sphi 0, %s89
      %s91 = sphi 0, %s89
      %s92 = sphi 0, %s91
      %s106 = sphi 0, %s92
      %s112 = sphi 0, %s114
      %s115 = sphi 0, %s112
      %s116 = sphi 0, %s115
      %s132 = sphi 0, %s116
    $region4: #{tpu_custom_call.1} parent=1 // loop_header_branch
      %16 = sbr.rel (%p14) target = $region8
    $region5: #{tpu_custom_call.1} parent=1 // loop_body
      %s18 = ssub.s32 %s13, 1
      %s19 = ssub.s32 %s13, 2
      %s20 = sadd.s32 %s13, 1
      %s21 = ssub.s32 %s13, %s20
      %p22 = scmp.eq.s32.totalorder %s21, 0
      %s24 = sadd.s32 %s23, 1
      %s25 = scalar_select %p22, %s23, %s24
      %p28 = pneg %p22
      %p29 = scmp.eq.s32.totalorder %s13, 1
      %p30 = por %p28, %p29
      %p31 = scmp.ne.s32.totalorder %s23, %s26
      %p32 = scmp.eq.s32.totalorder %s13, 0
      %p33 = por %p31, %p32
      %p34 = scmp.ne.s32.totalorder %s23, %s26
      %p35 = scmp.eq.s32.totalorder %s18, 1
      %p36 = por %p34, %p35
      %p37 = scmp.ne.s32.totalorder %s26, %s27
      %p38 = scmp.eq.s32.totalorder %s18, 0
      %p39 = por %p37, %p38
      %p40 = scmp.ne.s32.totalorder %s26, %s27
      %p41 = scmp.eq.s32.totalorder %s19, 1
      %p42 = por %p40, %p41
      %p44 = scmp.ne.s32.totalorder %s27, %s43
      %p45 = scmp.eq.s32.totalorder %s19, 0
      %p46 = por %p44, %p45
      %s48 = sadd.s32 %s47, 1
      %p51 = scmp.eq.s32.totalorder %s13, 1
      %p52 = scmp.ne.s32.totalorder %s47, %s49
      %p53 = scmp.eq.s32.totalorder %s13, 0
      %p54 = por %p52, %p53
      %p55 = scmp.ne.s32.totalorder %s47, %s49
      %p56 = scmp.eq.s32.totalorder %s18, 1
      %p57 = por %p55, %p56
      %p58 = scmp.ne.s32.totalorder %s49, %s50
      %p59 = scmp.eq.s32.totalorder %s18, 0
      %p60 = por %p58, %p59
      %p61 = scmp.ne.s32.totalorder %s49, %s50
      %p62 = scmp.eq.s32.totalorder %s19, 1
      %p63 = por %p61, %p62
      %p65 = scmp.ne.s32.totalorder %s50, %s64
      %p66 = scmp.eq.s32.totalorder %s19, 0
      %p67 = por %p65, %p66
      %s69 = sadd.s32 %s68, 1
      %p72 = scmp.eq.s32.totalorder %s13, 1
      %p73 = scmp.ne.s32.totalorder %s68, %s70
      %p74 = scmp.eq.s32.totalorder %s13, 0
      %p75 = por %p73, %p74
      %p76 = scmp.ne.s32.totalorder %s68, %s70
      %p77 = scmp.eq.s32.totalorder %s18, 1
      %p78 = por %p76, %p77
      %p79 = scmp.ne.s32.totalorder %s70, %s71
      %p80 = scmp.eq.s32.totalorder %s18, 0
      %p81 = por %p79, %p80
      %p82 = scmp.ne.s32.totalorder %s70, %s71
      %p83 = scmp.eq.s32.totalorder %s19, 1
      %p84 = por %p82, %p83
      %p86 = scmp.ne.s32.totalorder %s71, %s85
      %p87 = scmp.eq.s32.totalorder %s19, 0
      %p88 = por %p86, %p87
      %s90 = sadd.s32 %s89, 1
      %p93 = scmp.eq.s32.totalorder %s13, 1
      %p94 = scmp.ne.s32.totalorder %s89, %s91
      %p95 = scmp.eq.s32.totalorder %s13, 0
      %p96 = por %p94, %p95
      %p97 = scmp.ne.s32.totalorder %s89, %s91
      %p98 = scmp.eq.s32.totalorder %s18, 1
      %p99 = por %p97, %p98
      %p100 = scmp.ne.s32.totalorder %s91, %s92
      %p101 = scmp.eq.s32.totalorder %s18, 0
      %p102 = por %p100, %p101
      %p103 = scmp.ne.s32.totalorder %s91, %s92
      %p104 = scmp.eq.s32.totalorder %s19, 1
      %p105 = por %p103, %p104
      %p107 = scmp.ne.s32.totalorder %s92, %s106
      %p108 = scmp.eq.s32.totalorder %s19, 0
      %p109 = por %p107, %p108
      %s110 = ssub.s32 %s13, %s20
      %p111 = scmp.eq.s32.totalorder %s110, 0
      %s113 = sadd.s32 %s112, 1
      %s114 = scalar_select %p111, %s112, %s113
      %p117 = pneg %p111
      %p118 = scmp.eq.s32.totalorder %s13, 1
      %p119 = por %p117, %p118
      %p120 = scmp.ne.s32.totalorder %s112, %s115
      %p121 = scmp.eq.s32.totalorder %s13, 0
      %p122 = por %p120, %p121
      %p123 = scmp.ne.s32.totalorder %s112, %s115
      %p124 = scmp.eq.s32.totalorder %s18, 1
      %p125 = por %p123, %p124
      %p126 = scmp.ne.s32.totalorder %s115, %s116
      %p127 = scmp.eq.s32.totalorder %s18, 0
      %p128 = por %p126, %p127
      %p129 = scmp.ne.s32.totalorder %s115, %s116
      %p130 = scmp.eq.s32.totalorder %s19, 1
      %p131 = por %p129, %p130
      %p133 = scmp.ne.s32.totalorder %s116, %s132
      %p134 = scmp.eq.s32.totalorder %s19, 0
      %p135 = por %p133, %p134
      %p136 = scmp.le.s32.totalorder 1, %s13
      %p137 = scmp.lt.s32.totalorder %s13, 3
      %p138 = pnand %p136, %p137
      %p139 = pneg %p138
      // Predicated region
      $region9: #{tpu_custom_call.1} parent=5 // pred_check
        _
      $region10: #{tpu_custom_call.1} parent=5 // pred_check_branch
        %141 = sbr.rel (%p138) target = $region12
      $region11: #{tpu_custom_call.1} parent=5 // pred_region
        %s142 = ssub.s32 %s13, 1
        // Predicated region
        $region13: #{tpu_custom_call.1} parent=11 // pred_check
          %p143 = pneg %p60
        $region14: #{tpu_custom_call.1} parent=11 // pred_check_branch
          %145 = sbr.rel (%p143) target = $region16
        $region15: #{tpu_custom_call.1} parent=11 // pred_region
          _
        $region16: #{tpu_custom_call.1} parent=11 // pred_fallthru
          _
        // Predicated region
        $region17: #{tpu_custom_call.1} parent=11 // pred_check
          %p146 = pneg %p81
        $region18: #{tpu_custom_call.1} parent=11 // pred_check_branch
          %148 = sbr.rel (%p146) target = $region20
        $region19: #{tpu_custom_call.1} parent=11 // pred_region
          _
        $region20: #{tpu_custom_call.1} parent=11 // pred_fallthru
          _
        // Predicated region
        $region21: #{tpu_custom_call.1} parent=11 // pred_check
          %p149 = pneg %p102
        $region22: #{tpu_custom_call.1} parent=11 // pred_check_branch
          %151 = sbr.rel (%p149) target = $region24
        $region23: #{tpu_custom_call.1} parent=11 // pred_region
          _
        $region24: #{tpu_custom_call.1} parent=11 // pred_fallthru
          _
      $region12: #{tpu_custom_call.1} parent=5 // pred_fallthru
        _
      %p152 = scmp.lt.s32.totalorder %s13, 2
      // Predicated region
      $region25: #{tpu_custom_call.1} parent=5 // pred_check
        %p153 = pneg %p152
      $region26: #{tpu_custom_call.1} parent=5 // pred_check_branch
        %155 = sbr.rel (%p153) target = $region28
      $region27: #{tpu_custom_call.1} parent=5 // pred_region
        // Predicated region
        $region29: #{tpu_custom_call.1} parent=27 // pred_check
          %p156 = pneg %p33
        $region30: #{tpu_custom_call.1} parent=27 // pred_check_branch
          %158 = sbr.rel (%p156) target = $region32
        $region31: #{tpu_custom_call.1} parent=27 // pred_region
          %s159 = smul.u32 32, %s13
          %p160 = scmp.lt.s32.totalorder %s159, 63
          %s161 = scalar_select %p160, %s159, 63
          %s162 = smul.addr %s161, 8
          %s163 = scalar_lea.vmem %s0, %s162
          %s164 = smul.u32 32, %s13
        $region32: #{tpu_custom_call.1} parent=27 // pred_fallthru
          _
      $region28: #{tpu_custom_call.1} parent=5 // pred_fallthru
        _
      %p165 = scmp.le.s32.totalorder 1, %s13
      %p166 = scmp.lt.s32.totalorder %s13, 3
      %p167 = pnand %p165, %p166
      %p168 = pneg %p167
      // Predicated region
      $region33: #{tpu_custom_call.1} parent=5 // pred_check
        _
      $region34: #{tpu_custom_call.1} parent=5 // pred_check_branch
        %170 = sbr.rel (%p167) target = $region36
      $region35: #{tpu_custom_call.1} parent=5 // pred_region
        %s171 = ssub.s32 %s13, 1
        %s172 = smul.u32 32, %s18
        %p173 = scmp.lt.s32.totalorder %s172, 63
        %s174 = scalar_select %p173, %s172, 63
        %s175 = smul.addr %s174, 8
        %s176 = scalar_lea.vmem %s0, %s175
        %p177 = pneg %p39
        %p178 = pneg %p36
        %p179 = pneg %p60
        %p180 = pneg %p57
        %p181 = pneg %p81
        %p182 = pneg %p78
        %p183 = pneg %p102
        %p184 = pneg %p99
        %p185 = pneg %p128
        %p186 = pneg %p125
        %s187 = sand.u32 %s115, 1
        %s188 = scalar_lea.sflag [#allocation3], %s187
        %s189 = sand.u32 %s115, 1
        %s190 = smul.addr %s189, 256
        %s191 = scalar_lea.vmem [#allocation2], %s190
        %s192 = smul.u32 32, %s18
        %p193 = scmp.lt.s32.totalorder %s192, 63
        %s194 = scalar_select %p193, %s192, 63
        %s195 = smul.addr %s194, 8
        %s196 = scalar_lea.vmem %s0, %s195
        %s197 = smul.u32 32, %s18
        %s198 = smul.u32 32, %s18
        %v200 = vld [vmem:[%s3] sm:$0x7]
        %v201 = vld [vmem:[%s196] sm:$0xff]
        %v202 = vld [vmem:[%s196 + $0x8] sm:$0xff]
        %v203 = vld [vmem:[%s196 + $0x10] sm:$0xff]
        %v204 = vld [vmem:[%s196 + $0x18] sm:$0xff]
        %v205 = vld [vmem:[%s196 + $0x20] sm:$0xff]
        %v206 = vld [vmem:[%s196 + $0x28] sm:$0xff]
        %v207 = vld [vmem:[%s196 + $0x30] sm:$0xff]
        %v208 = vld [vmem:[%s196 + $0x38] sm:$0xff]
        %v209 = vld [vmem:[%s196 + $0x40] sm:$0xff]
        %v210 = vld [vmem:[%s196 + $0x48] sm:$0xff]
        %v211 = vld [vmem:[%s196 + $0x50] sm:$0xff]
        %v212 = vld [vmem:[%s196 + $0x58] sm:$0xff]
        %v213 = vld [vmem:[%s196 + $0x60] sm:$0xff]
        %v214 = vld [vmem:[%s196 + $0x68] sm:$0xff]
        %v215 = vld [vmem:[%s196 + $0x70] sm:$0xff]
        %v216 = vld [vmem:[%s196 + $0x78] sm:$0xff]
        %v217 = vld [vmem:[%s196 + $0x80] sm:$0xff]
        %v218 = vld [vmem:[%s196 + $0x88] sm:$0xff]
        %v219 = vld [vmem:[%s196 + $0x90] sm:$0xff]
        %v220 = vld [vmem:[%s196 + $0x98] sm:$0xff]
        %v221 = vld [vmem:[%s196 + $0xa0] sm:$0xff]
        %v222 = vld [vmem:[%s196 + $0xa8] sm:$0xff]
        %v223 = vld [vmem:[%s196 + $0xb0] sm:$0xff]
        %v224 = vld [vmem:[%s196 + $0xb8] sm:$0xff]
        %v225 = vld [vmem:[%s196 + $0xc0] sm:$0xff]
        %v226 = vld [vmem:[%s196 + $0xc8] sm:$0xff]
        %v227 = vld [vmem:[%s196 + $0xd0] sm:$0xff]
        %v228 = vld [vmem:[%s196 + $0xd8] sm:$0xff]
        %v229 = vld [vmem:[%s196 + $0xe0] sm:$0xff]
        %v230 = vld [vmem:[%s196 + $0xe8] sm:$0xff]
        %v231 = vld [vmem:[%s196 + $0xf0] sm:$0xff]
        %v232 = vld [vmem:[%s196 + $0xf8] sm:$0xff]
        %v233 = vpack.c.bf16 %v202, %v201
        %v234 = vpack.c.bf16 %v204, %v203
        %v235 = vpack.c.bf16 %v206, %v205
        %v236 = vpack.c.bf16 %v208, %v207
        %v237 = vpack.c.bf16 %v210, %v209
        %v238 = vpack.c.bf16 %v212, %v211
        %v239 = vpack.c.bf16 %v214, %v213
        %v240 = vpack.c.bf16 %v216, %v215
        %v241 = vpack.c.bf16 %v218, %v217
        %v242 = vpack.c.bf16 %v220, %v219
        %v243 = vpack.c.bf16 %v222, %v221
        %v244 = vpack.c.bf16 %v224, %v223
        %v245 = vpack.c.bf16 %v226, %v225
        %v246 = vpack.c.bf16 %v228, %v227
        %v247 = vpack.c.bf16 %v230, %v229
        %v248 = vpack.c.bf16 %v232, %v231
        %v249 = vld [vmem:[%s1] sm:$0x1]
        %v250 = vlaneseq
        %v251 = vshrl.u32 %v250, 7
        %v252 = vsub.s32 0, %v251
        %v253 = vrot.slane %v200, %v252
        %vm254 = vcmask 15360
        %v256 = vsel %vm254, %v233, 0
        %v259 = vsel %vm254, %v234, 0
        %v262 = vsel %vm254, %v235, 0
        %v265 = vsel %vm254, %v236, 0
        %v268 = vsel %vm254, %v237, 0
        %v271 = vsel %vm254, %v238, 0
        %v274 = vsel %vm254, %v239, 0
        %v277 = vsel %vm254, %v240, 0
        %v280 = vsel %vm254, %v241, 0
        %v283 = vsel %vm254, %v242, 0
        %v286 = vsel %vm254, %v243, 0
        %v289 = vsel %vm254, %v244, 0
        %v292 = vsel %vm254, %v245, 0
        %v295 = vsel %vm254, %v246, 0
        %v298 = vsel %vm254, %v247, 0
        %v301 = vsel %vm254, %v248, 0
        %vm303 = vcmask 1040384
        %v305 = vsel %vm303, %v249, 0
        %307 = vmatprep.subr.bf16.mxu0 0
        %308 = vmatpush1.bf16.msra.mxu0 0
        %309 = vmatprep.subr.bf16.mxu0 0
        %310 = vmatpush1.bf16.msra.mxu0 0
        %311 = vmatprep.subr.bf16.mxu0 0
        %312 = vmatpush1.bf16.msra.mxu0 0
        %313 = vmatprep.subr.bf16.mxu0 0
        %314 = vmatpush1.bf16.msra.mxu0 0
        %315 = vmatprep.subr.bf16.mxu0 0
        %316 = vmatpush1.bf16.msra.mxu0 0
        %317 = vmatprep.subr.bf16.mxu0 0
        %318 = vmatpush1.bf16.msra.mxu0 0
        %319 = vmatprep.subr.bf16.mxu0 0
        %320 = vmatpush1.bf16.msra.mxu0 0
        %321 = vmatprep.subr.bf16.mxu0 0
        %322 = vmatpush1.bf16.msra.mxu0 %v305
        %323 = vmatprep.subr.bf16.mxu0 0
        %324 = vmatpush2.bf16.msra.mxu0 0
        %325 = vmatprep.subr.bf16.mxu0 0
        %326 = vmatpush2.bf16.msra.mxu0 0
        %327 = vmatprep.subr.bf16.mxu0 0
        %328 = vmatpush2.bf16.msra.mxu0 0
        %329 = vmatprep.subr.bf16.mxu0 0
        %330 = vmatpush2.bf16.msra.mxu0 0
        %331 = vmatprep.subr.bf16.mxu0 0
        %332 = vmatpush2.bf16.msra.mxu0 0
        %333 = vmatprep.subr.bf16.mxu0 0
        %334 = vmatpush2.bf16.msra.mxu0 0
        %335 = vmatprep.subr.bf16.mxu0 0
        %336 = vmatpush2.bf16.msra.mxu0 0
        %337 = vmatprep.subr.bf16.mxu0 0
        %338 = vmatpush2.bf16.msra.mxu0 0
        %339 = vmatprep.mubr.bf16.mxu0 0
        %340 = vmatmul.mubr.bf16.gmra.mxu0 %v256
        %v341 = vpop.f32.mrf.mxu0
        %v342 = vadd.f32 %v253, %v341
        %v343 = vpop.f32.mrf.mxu0
        %v344 = vpop.f32.mrf.mxu0
        %v345 = vadd.f32 %v253, %v344
        %v346 = vpop.f32.mrf.mxu0
        %347 = vmatprep.mubr.bf16.mxu0 0
        %348 = vmatmul.mubr.bf16.gmra.mxu0 %v259
        %v349 = vpop.f32.mrf.mxu0
        %v350 = vadd.f32 %v253, %v349
        %v351 = vpop.f32.mrf.mxu0
        %v352 = vpop.f32.mrf.mxu0
        %v353 = vadd.f32 %v253, %v352
        %v354 = vpop.f32.mrf.mxu0
        %355 = vmatprep.mubr.bf16.mxu0 0
        %356 = vmatmul.mubr.bf16.gmra.mxu0 %v262
        %v357 = vpop.f32.mrf.mxu0
        %v358 = vadd.f32 %v253, %v357
        %v359 = vpop.f32.mrf.mxu0
        %v360 = vpop.f32.mrf.mxu0
        %v361 = vadd.f32 %v253, %v360
        %v362 = vpop.f32.mrf.mxu0
        %363 = vmatprep.mubr.bf16.mxu0 0
        %364 = vmatmul.mubr.bf16.gmra.mxu0 %v265
        %v365 = vpop.f32.mrf.mxu0
        %v366 = vadd.f32 %v253, %v365
        %v367 = vpop.f32.mrf.mxu0
        %v368 = vpop.f32.mrf.mxu0
        %v369 = vadd.f32 %v253, %v368
        %v370 = vpop.f32.mrf.mxu0
        %371 = vmatprep.mubr.bf16.mxu0 0
        %372 = vmatmul.mubr.bf16.gmra.mxu0 %v268
        %v373 = vpop.f32.mrf.mxu0
        %v374 = vadd.f32 %v253, %v373
        %v375 = vpop.f32.mrf.mxu0
        %v376 = vpop.f32.mrf.mxu0
        %v377 = vadd.f32 %v253, %v376
        %v378 = vpop.f32.mrf.mxu0
        %379 = vmatprep.mubr.bf16.mxu0 0
        %380 = vmatmul.mubr.bf16.gmra.mxu0 %v271
        %v381 = vpop.f32.mrf.mxu0
        %v382 = vadd.f32 %v253, %v381
        %v383 = vpop.f32.mrf.mxu0
        %v384 = vpop.f32.mrf.mxu0
        %v385 = vadd.f32 %v253, %v384
        %v386 = vpop.f32.mrf.mxu0
        %387 = vmatprep.mubr.bf16.mxu0 0
        %388 = vmatmul.mubr.bf16.gmra.mxu0 %v274
        %v389 = vpop.f32.mrf.mxu0
        %v390 = vadd.f32 %v253, %v389
        %v391 = vpop.f32.mrf.mxu0
        %v392 = vpop.f32.mrf.mxu0
        %v393 = vadd.f32 %v253, %v392
        %v394 = vpop.f32.mrf.mxu0
        %395 = vmatprep.mubr.bf16.mxu0 0
        %396 = vmatmul.mubr.bf16.gmra.mxu0 %v277
        %v397 = vpop.f32.mrf.mxu0
        %v398 = vadd.f32 %v253, %v397
        %v399 = vpop.f32.mrf.mxu0
        %v400 = vpop.f32.mrf.mxu0
        %v401 = vadd.f32 %v253, %v400
        %v402 = vpop.f32.mrf.mxu0
        %403 = vmatprep.mubr.bf16.mxu0 0
        %404 = vmatmul.mubr.bf16.gmra.mxu0 %v280
        %v405 = vpop.f32.mrf.mxu0
        %v406 = vadd.f32 %v253, %v405
        %v407 = vpop.f32.mrf.mxu0
        %v408 = vpop.f32.mrf.mxu0
        %v409 = vadd.f32 %v253, %v408
        %v410 = vpop.f32.mrf.mxu0
        %411 = vmatprep.mubr.bf16.mxu0 0
        %412 = vmatmul.mubr.bf16.gmra.mxu0 %v283
        %v413 = vpop.f32.mrf.mxu0
        %v414 = vadd.f32 %v253, %v413
        %v415 = vpop.f32.mrf.mxu0
        %v416 = vpop.f32.mrf.mxu0
        %v417 = vadd.f32 %v253, %v416
        %v418 = vpop.f32.mrf.mxu0
        %419 = vmatprep.mubr.bf16.mxu0 0
        %420 = vmatmul.mubr.bf16.gmra.mxu0 %v286
        %v421 = vpop.f32.mrf.mxu0
        %v422 = vadd.f32 %v253, %v421
        %v423 = vpop.f32.mrf.mxu0
        %v424 = vpop.f32.mrf.mxu0
        %v425 = vadd.f32 %v253, %v424
        %v426 = vpop.f32.mrf.mxu0
        %427 = vmatprep.mubr.bf16.mxu0 0
        %428 = vmatmul.mubr.bf16.gmra.mxu0 %v289
        %v429 = vpop.f32.mrf.mxu0
        %v430 = vadd.f32 %v253, %v429
        %v431 = vpop.f32.mrf.mxu0
        %v432 = vpop.f32.mrf.mxu0
        %v433 = vadd.f32 %v253, %v432
        %v434 = vpop.f32.mrf.mxu0
        %435 = vmatprep.mubr.bf16.mxu0 0
        %436 = vmatmul.mubr.bf16.gmra.mxu0 %v292
        %v437 = vpop.f32.mrf.mxu0
        %v438 = vadd.f32 %v253, %v437
        %v439 = vpop.f32.mrf.mxu0
        %v440 = vpop.f32.mrf.mxu0
        %v441 = vadd.f32 %v253, %v440
        %v442 = vpop.f32.mrf.mxu0
        %443 = vmatprep.mubr.bf16.mxu0 0
        %444 = vmatmul.mubr.bf16.gmra.mxu0 %v295
        %v445 = vpop.f32.mrf.mxu0
        %v446 = vadd.f32 %v253, %v445
        %v447 = vpop.f32.mrf.mxu0
        %v448 = vpop.f32.mrf.mxu0
        %v449 = vadd.f32 %v253, %v448
        %v450 = vpop.f32.mrf.mxu0
        %451 = vmatprep.mubr.bf16.mxu0 0
        %452 = vmatmul.mubr.bf16.gmra.mxu0 %v298
        %v453 = vpop.f32.mrf.mxu0
        %v454 = vadd.f32 %v253, %v453
        %v455 = vpop.f32.mrf.mxu0
        %v456 = vpop.f32.mrf.mxu0
        %v457 = vadd.f32 %v253, %v456
        %v458 = vpop.f32.mrf.mxu0
        %459 = vmatprep.mubr.bf16.mxu0 0
        %460 = vmatmul.mubr.bf16.gmra.mxu0 %v301
        %v461 = vpop.f32.mrf.mxu0
        %v462 = vadd.f32 %v253, %v461
        %v463 = vpop.f32.mrf.mxu0
        %v464 = vpop.f32.mrf.mxu0
        %v465 = vadd.f32 %v253, %v464
        %v466 = vpop.f32.mrf.mxu0
        %467 = vdwg.mxu0
        %v468 = vmul.f32 %v342, 0.01
        %v469 = vmul.f32 %v345, 0.01
        %v470 = vmul.f32 %v350, 0.01
        %v471 = vmul.f32 %v353, 0.01
        %v472 = vmul.f32 %v358, 0.01
        %v473 = vmul.f32 %v361, 0.01
        %v474 = vmul.f32 %v366, 0.01
        %v475 = vmul.f32 %v369, 0.01
        %v476 = vmul.f32 %v374, 0.01
        %v477 = vmul.f32 %v377, 0.01
        %v478 = vmul.f32 %v382, 0.01
        %v479 = vmul.f32 %v385, 0.01
        %v480 = vmul.f32 %v390, 0.01
        %v481 = vmul.f32 %v393, 0.01
        %v482 = vmul.f32 %v398, 0.01
        %v483 = vmul.f32 %v401, 0.01
        %v484 = vmul.f32 %v406, 0.01
        %v485 = vmul.f32 %v409, 0.01
        %v486 = vmul.f32 %v414, 0.01
        %v487 = vmul.f32 %v417, 0.01
        %v488 = vmul.f32 %v422, 0.01
        %v489 = vmul.f32 %v425, 0.01
        %v490 = vmul.f32 %v430, 0.01
        %v491 = vmul.f32 %v433, 0.01
        %v492 = vmul.f32 %v438, 0.01
        %v493 = vmul.f32 %v441, 0.01
        %v494 = vmul.f32 %v446, 0.01
        %v495 = vmul.f32 %v449, 0.01
        %v496 = vmul.f32 %v454, 0.01
        %v497 = vmul.f32 %v457, 0.01
        %v498 = vmul.f32 %v462, 0.01
        %v499 = vmul.f32 %v465, 0.01
        %v500 = vmax.f32 %v342, %v468
        %v501 = vmax.f32 %v345, %v469
        %v502 = vmax.f32 %v350, %v470
        %v503 = vmax.f32 %v353, %v471
        %v504 = vmax.f32 %v358, %v472
        %v505 = vmax.f32 %v361, %v473
        %v506 = vmax.f32 %v366, %v474
        %v507 = vmax.f32 %v369, %v475
        %v508 = vmax.f32 %v374, %v476
        %v509 = vmax.f32 %v377, %v477
        %v510 = vmax.f32 %v382, %v478
        %v511 = vmax.f32 %v385, %v479
        %v512 = vmax.f32 %v390, %v480
        %v513 = vmax.f32 %v393, %v481
        %v514 = vmax.f32 %v398, %v482
        %v515 = vmax.f32 %v401, %v483
        %v516 = vmax.f32 %v406, %v484
        %v517 = vmax.f32 %v409, %v485
        %v518 = vmax.f32 %v414, %v486
        %v519 = vmax.f32 %v417, %v487
        %v520 = vmax.f32 %v422, %v488
        %v521 = vmax.f32 %v425, %v489
        %v522 = vmax.f32 %v430, %v490
        %v523 = vmax.f32 %v433, %v491
        %v524 = vmax.f32 %v438, %v492
        %v525 = vmax.f32 %v441, %v493
        %v526 = vmax.f32 %v446, %v494
        %v527 = vmax.f32 %v449, %v495
        %v528 = vmax.f32 %v454, %v496
        %v529 = vmax.f32 %v457, %v497
        %v530 = vmax.f32 %v462, %v498
        %v531 = vmax.f32 %v465, %v499
        %v532 = vpack.c.bf16 %v501, %v500
        %v533 = vpack.c.bf16 %v503, %v502
        %v534 = vpack.c.bf16 %v505, %v504
        %v535 = vpack.c.bf16 %v507, %v506
        %v536 = vpack.c.bf16 %v509, %v508
        %v537 = vpack.c.bf16 %v511, %v510
        %v538 = vpack.c.bf16 %v513, %v512
        %v539 = vpack.c.bf16 %v515, %v514
        %v540 = vpack.c.bf16 %v517, %v516
        %v541 = vpack.c.bf16 %v519, %v518
        %v542 = vpack.c.bf16 %v521, %v520
        %v543 = vpack.c.bf16 %v523, %v522
        %v544 = vpack.c.bf16 %v525, %v524
        %v545 = vpack.c.bf16 %v527, %v526
        %v546 = vpack.c.bf16 %v529, %v528
        %v547 = vpack.c.bf16 %v531, %v530
        %v548 = vld [vmem:[%s2] sm:$0xf]
        %v549 = vld [vmem:[%s2 + $0x4] sm:$0xf]
        %v550 = vld [vmem:[%s2 + $0x8] sm:$0xf]
        %v551 = vld [vmem:[%s2 + $0xc] sm:$0xf]
        %v552 = vld [vmem:[%s2 + $0x10] sm:$0xf]
        %v553 = vld [vmem:[%s2 + $0x14] sm:$0xf]
        %v554 = vld [vmem:[%s2 + $0x18] sm:$0xf]
        %v555 = vld [vmem:[%s2 + $0x1c] sm:$0xf]
        %v556 = vld [vmem:[%s2 + $0x20] sm:$0xf]
        %v557 = vld [vmem:[%s2 + $0x24] sm:$0xf]
        %v558 = vld [vmem:[%s2 + $0x28] sm:$0xf]
        %v559 = vld [vmem:[%s2 + $0x2c] sm:$0xf]
        %v560 = vld [vmem:[%s2 + $0x30] sm:$0xf]
        %v561 = vld [vmem:[%s2 + $0x34] sm:$0xf]
        %v562 = vld [vmem:[%s2 + $0x38] sm:$0xf]
        %v563 = vld [vmem:[%s2 + $0x3c] sm:$0xf]
        %v564 = vlaneseq
        %v565 = vshrl.u32 %v564, 7
        %v566 = vsub.s32 1, %v565
        %v567 = vrot.slane %v200, %v566
        %v584 = vunpack.c.l.b16 %v548
        %v585 = vunpack.c.l.b16 %v549
        %v586 = vunpack.c.l.b16 %v550
        %v587 = vunpack.c.l.b16 %v551
        %v588 = vunpack.c.l.b16 %v552
        %v589 = vunpack.c.l.b16 %v553
        %v590 = vunpack.c.l.b16 %v554
        %v591 = vunpack.c.l.b16 %v555
        %v592 = vunpack.c.l.b16 %v556
        %v593 = vunpack.c.l.b16 %v557
        %v594 = vunpack.c.l.b16 %v558
        %v595 = vunpack.c.l.b16 %v559
        %v596 = vunpack.c.l.b16 %v560
        %v597 = vunpack.c.l.b16 %v561
        %v598 = vunpack.c.l.b16 %v562
        %v599 = vunpack.c.l.b16 %v563
        %v600 = vpack.c.b16 %v585, %v584
        %v601 = vpack.c.b16 %v587, %v586
        %v602 = vpack.c.b16 %v589, %v588
        %v603 = vpack.c.b16 %v591, %v590
        %v604 = vpack.c.b16 %v593, %v592
        %v605 = vpack.c.b16 %v595, %v594
        %v606 = vpack.c.b16 %v597, %v596
        %v607 = vpack.c.b16 %v599, %v598
        %616 = vmatprep.subr.bf16.mxu0 0
        %617 = vmatpush1.bf16.msra.mxu0 %v607
        %618 = vmatprep.subr.bf16.mxu0 0
        %619 = vmatpush1.bf16.msra.mxu0 %v606
        %620 = vmatprep.subr.bf16.mxu0 0
        %621 = vmatpush1.bf16.msra.mxu0 %v605
        %622 = vmatprep.subr.bf16.mxu0 0
        %623 = vmatpush1.bf16.msra.mxu0 %v604
        %624 = vmatprep.subr.bf16.mxu0 0
        %625 = vmatpush1.bf16.msra.mxu0 %v603
        %626 = vmatprep.subr.bf16.mxu0 0
        %627 = vmatpush1.bf16.msra.mxu0 %v602
        %628 = vmatprep.subr.bf16.mxu0 0
        %629 = vmatpush1.bf16.msra.mxu0 %v601
        %630 = vmatprep.subr.bf16.mxu0 0
        %631 = vmatpush1.bf16.msra.mxu0 %v600
        %632 = vmatprep.subr.bf16.mxu0 0
        %633 = vmatpush2.bf16.msra.mxu0 0
        %634 = vmatprep.subr.bf16.mxu0 0
        %635 = vmatpush2.bf16.msra.mxu0 0
        %636 = vmatprep.subr.bf16.mxu0 0
        %637 = vmatpush2.bf16.msra.mxu0 0
        %638 = vmatprep.subr.bf16.mxu0 0
        %639 = vmatpush2.bf16.msra.mxu0 0
        %640 = vmatprep.subr.bf16.mxu0 0
        %641 = vmatpush2.bf16.msra.mxu0 0
        %642 = vmatprep.subr.bf16.mxu0 0
        %643 = vmatpush2.bf16.msra.mxu0 0
        %644 = vmatprep.subr.bf16.mxu0 0
        %645 = vmatpush2.bf16.msra.mxu0 0
        %646 = vmatprep.subr.bf16.mxu0 0
        %647 = vmatpush2.bf16.msra.mxu0 0
        %648 = vmatprep.mubr.bf16.mxu0 0
        %649 = vmatmul.mubr.bf16.gmra.mxu0 %v532
        %v650 = vpop.f32.mrf.mxu0
        %v651 = vadd.f32 %v567, %v650
        %v652 = vpop.f32.mrf.mxu0
        %v653 = vpop.f32.mrf.mxu0
        %v654 = vadd.f32 %v567, %v653
        %v655 = vpop.f32.mrf.mxu0
        %656 = vmatprep.mubr.bf16.mxu0 0
        %657 = vmatmul.mubr.bf16.gmra.mxu0 %v533
        %v658 = vpop.f32.mrf.mxu0
        %v659 = vadd.f32 %v567, %v658
        %v660 = vpop.f32.mrf.mxu0
        %v661 = vpop.f32.mrf.mxu0
        %v662 = vadd.f32 %v567, %v661
        %v663 = vpop.f32.mrf.mxu0
        %664 = vmatprep.mubr.bf16.mxu0 0
        %665 = vmatmul.mubr.bf16.gmra.mxu0 %v534
        %v666 = vpop.f32.mrf.mxu0
        %v667 = vadd.f32 %v567, %v666
        %v668 = vpop.f32.mrf.mxu0
        %v669 = vpop.f32.mrf.mxu0
        %v670 = vadd.f32 %v567, %v669
        %v671 = vpop.f32.mrf.mxu0
        %672 = vmatprep.mubr.bf16.mxu0 0
        %673 = vmatmul.mubr.bf16.gmra.mxu0 %v535
        %v674 = vpop.f32.mrf.mxu0
        %v675 = vadd.f32 %v567, %v674
        %v676 = vpop.f32.mrf.mxu0
        %v677 = vpop.f32.mrf.mxu0
        %v678 = vadd.f32 %v567, %v677
        %v679 = vpop.f32.mrf.mxu0
        %680 = vmatprep.mubr.bf16.mxu0 0
        %681 = vmatmul.mubr.bf16.gmra.mxu0 %v536
        %v682 = vpop.f32.mrf.mxu0
        %v683 = vadd.f32 %v567, %v682
        %v684 = vpop.f32.mrf.mxu0
        %v685 = vpop.f32.mrf.mxu0
        %v686 = vadd.f32 %v567, %v685
        %v687 = vpop.f32.mrf.mxu0
        %688 = vmatprep.mubr.bf16.mxu0 0
        %689 = vmatmul.mubr.bf16.gmra.mxu0 %v537
        %v690 = vpop.f32.mrf.mxu0
        %v691 = vadd.f32 %v567, %v690
        %v692 = vpop.f32.mrf.mxu0
        %v693 = vpop.f32.mrf.mxu0
        %v694 = vadd.f32 %v567, %v693
        %v695 = vpop.f32.mrf.mxu0
        %696 = vmatprep.mubr.bf16.mxu0 0
        %697 = vmatmul.mubr.bf16.gmra.mxu0 %v538
        %v698 = vpop.f32.mrf.mxu0
        %v699 = vadd.f32 %v567, %v698
        %v700 = vpop.f32.mrf.mxu0
        %v701 = vpop.f32.mrf.mxu0
        %v702 = vadd.f32 %v567, %v701
        %v703 = vpop.f32.mrf.mxu0
        %704 = vmatprep.mubr.bf16.mxu0 0
        %705 = vmatmul.mubr.bf16.gmra.mxu0 %v539
        %v706 = vpop.f32.mrf.mxu0
        %v707 = vadd.f32 %v567, %v706
        %v708 = vpop.f32.mrf.mxu0
        %v709 = vpop.f32.mrf.mxu0
        %v710 = vadd.f32 %v567, %v709
        %v711 = vpop.f32.mrf.mxu0
        %712 = vmatprep.mubr.bf16.mxu0 0
        %713 = vmatmul.mubr.bf16.gmra.mxu0 %v540
        %v714 = vpop.f32.mrf.mxu0
        %v715 = vadd.f32 %v567, %v714
        %v716 = vpop.f32.mrf.mxu0
        %v717 = vpop.f32.mrf.mxu0
        %v718 = vadd.f32 %v567, %v717
        %v719 = vpop.f32.mrf.mxu0
        %720 = vmatprep.mubr.bf16.mxu0 0
        %721 = vmatmul.mubr.bf16.gmra.mxu0 %v541
        %v722 = vpop.f32.mrf.mxu0
        %v723 = vadd.f32 %v567, %v722
        %v724 = vpop.f32.mrf.mxu0
        %v725 = vpop.f32.mrf.mxu0
        %v726 = vadd.f32 %v567, %v725
        %v727 = vpop.f32.mrf.mxu0
        %728 = vmatprep.mubr.bf16.mxu0 0
        %729 = vmatmul.mubr.bf16.gmra.mxu0 %v542
        %v730 = vpop.f32.mrf.mxu0
        %v731 = vadd.f32 %v567, %v730
        %v732 = vpop.f32.mrf.mxu0
        %v733 = vpop.f32.mrf.mxu0
        %v734 = vadd.f32 %v567, %v733
        %v735 = vpop.f32.mrf.mxu0
        %736 = vmatprep.mubr.bf16.mxu0 0
        %737 = vmatmul.mubr.bf16.gmra.mxu0 %v543
        %v738 = vpop.f32.mrf.mxu0
        %v739 = vadd.f32 %v567, %v738
        %v740 = vpop.f32.mrf.mxu0
        %v741 = vpop.f32.mrf.mxu0
        %v742 = vadd.f32 %v567, %v741
        %v743 = vpop.f32.mrf.mxu0
        %744 = vmatprep.mubr.bf16.mxu0 0
        %745 = vmatmul.mubr.bf16.gmra.mxu0 %v544
        %v746 = vpop.f32.mrf.mxu0
        %v747 = vadd.f32 %v567, %v746
        %v748 = vpop.f32.mrf.mxu0
        %v749 = vpop.f32.mrf.mxu0
        %v750 = vadd.f32 %v567, %v749
        %v751 = vpop.f32.mrf.mxu0
        %752 = vmatprep.mubr.bf16.mxu0 0
        %753 = vmatmul.mubr.bf16.gmra.mxu0 %v545
        %v754 = vpop.f32.mrf.mxu0
        %v755 = vadd.f32 %v567, %v754
        %v756 = vpop.f32.mrf.mxu0
        %v757 = vpop.f32.mrf.mxu0
        %v758 = vadd.f32 %v567, %v757
        %v759 = vpop.f32.mrf.mxu0
        %760 = vmatprep.mubr.bf16.mxu0 0
        %761 = vmatmul.mubr.bf16.gmra.mxu0 %v546
        %v762 = vpop.f32.mrf.mxu0
        %v763 = vadd.f32 %v567, %v762
        %v764 = vpop.f32.mrf.mxu0
        %v765 = vpop.f32.mrf.mxu0
        %v766 = vadd.f32 %v567, %v765
        %v767 = vpop.f32.mrf.mxu0
        %768 = vmatprep.mubr.bf16.mxu0 0
        %769 = vmatmul.mubr.bf16.gmra.mxu0 %v547
        %v770 = vpop.f32.mrf.mxu0
        %v771 = vadd.f32 %v567, %v770
        %v772 = vpop.f32.mrf.mxu0
        %v773 = vpop.f32.mrf.mxu0
        %v774 = vadd.f32 %v567, %v773
        %v775 = vpop.f32.mrf.mxu0
        %776 = vdwg.mxu0
        %v777 = vmul.f32 %v651, 0.01
        %v778 = vmul.f32 %v654, 0.01
        %v779 = vmul.f32 %v659, 0.01
        %v780 = vmul.f32 %v662, 0.01
        %v781 = vmul.f32 %v667, 0.01
        %v782 = vmul.f32 %v670, 0.01
        %v783 = vmul.f32 %v675, 0.01
        %v784 = vmul.f32 %v678, 0.01
        %v785 = vmul.f32 %v683, 0.01
        %v786 = vmul.f32 %v686, 0.01
        %v787 = vmul.f32 %v691, 0.01
        %v788 = vmul.f32 %v694, 0.01
        %v789 = vmul.f32 %v699, 0.01
        %v790 = vmul.f32 %v702, 0.01
        %v791 = vmul.f32 %v707, 0.01
        %v792 = vmul.f32 %v710, 0.01
        %v793 = vmul.f32 %v715, 0.01
        %v794 = vmul.f32 %v718, 0.01
        %v795 = vmul.f32 %v723, 0.01
        %v796 = vmul.f32 %v726, 0.01
        %v797 = vmul.f32 %v731, 0.01
        %v798 = vmul.f32 %v734, 0.01
        %v799 = vmul.f32 %v739, 0.01
        %v800 = vmul.f32 %v742, 0.01
        %v801 = vmul.f32 %v747, 0.01
        %v802 = vmul.f32 %v750, 0.01
        %v803 = vmul.f32 %v755, 0.01
        %v804 = vmul.f32 %v758, 0.01
        %v805 = vmul.f32 %v763, 0.01
        %v806 = vmul.f32 %v766, 0.01
        %v807 = vmul.f32 %v771, 0.01
        %v808 = vmul.f32 %v774, 0.01
        %v809 = vmax.f32 %v651, %v777
        %v810 = vmax.f32 %v654, %v778
        %v811 = vmax.f32 %v659, %v779
        %v812 = vmax.f32 %v662, %v780
        %v813 = vmax.f32 %v667, %v781
        %v814 = vmax.f32 %v670, %v782
        %v815 = vmax.f32 %v675, %v783
        %v816 = vmax.f32 %v678, %v784
        %v817 = vmax.f32 %v683, %v785
        %v818 = vmax.f32 %v686, %v786
        %v819 = vmax.f32 %v691, %v787
        %v820 = vmax.f32 %v694, %v788
        %v821 = vmax.f32 %v699, %v789
        %v822 = vmax.f32 %v702, %v790
        %v823 = vmax.f32 %v707, %v791
        %v824 = vmax.f32 %v710, %v792
        %v825 = vmax.f32 %v715, %v793
        %v826 = vmax.f32 %v718, %v794
        %v827 = vmax.f32 %v723, %v795
        %v828 = vmax.f32 %v726, %v796
        %v829 = vmax.f32 %v731, %v797
        %v830 = vmax.f32 %v734, %v798
        %v831 = vmax.f32 %v739, %v799
        %v832 = vmax.f32 %v742, %v800
        %v833 = vmax.f32 %v747, %v801
        %v834 = vmax.f32 %v750, %v802
        %v835 = vmax.f32 %v755, %v803
        %v836 = vmax.f32 %v758, %v804
        %v837 = vmax.f32 %v763, %v805
        %v838 = vmax.f32 %v766, %v806
        %v839 = vmax.f32 %v771, %v807
        %v840 = vmax.f32 %v774, %v808
        %v841 = vpack.c.bf16 %v810, %v809
        %v842 = vpack.c.bf16 %v812, %v811
        %v843 = vpack.c.bf16 %v814, %v813
        %v844 = vpack.c.bf16 %v816, %v815
        %v845 = vpack.c.bf16 %v818, %v817
        %v846 = vpack.c.bf16 %v820, %v819
        %v847 = vpack.c.bf16 %v822, %v821
        %v848 = vpack.c.bf16 %v824, %v823
        %v849 = vpack.c.bf16 %v826, %v825
        %v850 = vpack.c.bf16 %v828, %v827
        %v851 = vpack.c.bf16 %v830, %v829
        %v852 = vpack.c.bf16 %v832, %v831
        %v853 = vpack.c.bf16 %v834, %v833
        %v854 = vpack.c.bf16 %v836, %v835
        %v855 = vpack.c.bf16 %v838, %v837
        %v856 = vpack.c.bf16 %v840, %v839
        %s857 = scalar_lea.vmem %s2, 64
        %v858 = vld [vmem:[%s857] sm:$0xf]
        %v859 = vld [vmem:[%s857 + $0x4] sm:$0xf]
        %v860 = vld [vmem:[%s857 + $0x8] sm:$0xf]
        %v861 = vld [vmem:[%s857 + $0xc] sm:$0xf]
        %v862 = vld [vmem:[%s857 + $0x10] sm:$0xf]
        %v863 = vld [vmem:[%s857 + $0x14] sm:$0xf]
        %v864 = vld [vmem:[%s857 + $0x18] sm:$0xf]
        %v865 = vld [vmem:[%s857 + $0x1c] sm:$0xf]
        %v866 = vld [vmem:[%s857 + $0x20] sm:$0xf]
        %v867 = vld [vmem:[%s857 + $0x24] sm:$0xf]
        %v868 = vld [vmem:[%s857 + $0x28] sm:$0xf]
        %v869 = vld [vmem:[%s857 + $0x2c] sm:$0xf]
        %v870 = vld [vmem:[%s857 + $0x30] sm:$0xf]
        %v871 = vld [vmem:[%s857 + $0x34] sm:$0xf]
        %v872 = vld [vmem:[%s857 + $0x38] sm:$0xf]
        %v873 = vld [vmem:[%s857 + $0x3c] sm:$0xf]
        %v874 = vlaneseq
        %v875 = vshrl.u32 %v874, 7
        %v876 = vsub.s32 2, %v875
        %v877 = vrot.slane %v200, %v876
        %v894 = vunpack.c.l.b16 %v858
        %v895 = vunpack.c.l.b16 %v859
        %v896 = vunpack.c.l.b16 %v860
        %v897 = vunpack.c.l.b16 %v861
        %v898 = vunpack.c.l.b16 %v862
        %v899 = vunpack.c.l.b16 %v863
        %v900 = vunpack.c.l.b16 %v864
        %v901 = vunpack.c.l.b16 %v865
        %v902 = vunpack.c.l.b16 %v866
        %v903 = vunpack.c.l.b16 %v867
        %v904 = vunpack.c.l.b16 %v868
        %v905 = vunpack.c.l.b16 %v869
        %v906 = vunpack.c.l.b16 %v870
        %v907 = vunpack.c.l.b16 %v871
        %v908 = vunpack.c.l.b16 %v872
        %v909 = vunpack.c.l.b16 %v873
        %v910 = vpack.c.b16 %v895, %v894
        %v911 = vpack.c.b16 %v897, %v896
        %v912 = vpack.c.b16 %v899, %v898
        %v913 = vpack.c.b16 %v901, %v900
        %v914 = vpack.c.b16 %v903, %v902
        %v915 = vpack.c.b16 %v905, %v904
        %v916 = vpack.c.b16 %v907, %v906
        %v917 = vpack.c.b16 %v909, %v908
        %926 = vmatprep.subr.bf16.mxu0 0
        %927 = vmatpush1.bf16.msra.mxu0 %v917
        %928 = vmatprep.subr.bf16.mxu0 0
        %929 = vmatpush1.bf16.msra.mxu0 %v916
        %930 = vmatprep.subr.bf16.mxu0 0
        %931 = vmatpush1.bf16.msra.mxu0 %v915
        %932 = vmatprep.subr.bf16.mxu0 0
        %933 = vmatpush1.bf16.msra.mxu0 %v914
        %934 = vmatprep.subr.bf16.mxu0 0
        %935 = vmatpush1.bf16.msra.mxu0 %v913
        %936 = vmatprep.subr.bf16.mxu0 0
        %937 = vmatpush1.bf16.msra.mxu0 %v912
        %938 = vmatprep.subr.bf16.mxu0 0
        %939 = vmatpush1.bf16.msra.mxu0 %v911
        %940 = vmatprep.subr.bf16.mxu0 0
        %941 = vmatpush1.bf16.msra.mxu0 %v910
        %942 = vmatprep.subr.bf16.mxu0 0
        %943 = vmatpush2.bf16.msra.mxu0 0
        %944 = vmatprep.subr.bf16.mxu0 0
        %945 = vmatpush2.bf16.msra.mxu0 0
        %946 = vmatprep.subr.bf16.mxu0 0
        %947 = vmatpush2.bf16.msra.mxu0 0
        %948 = vmatprep.subr.bf16.mxu0 0
        %949 = vmatpush2.bf16.msra.mxu0 0
        %950 = vmatprep.subr.bf16.mxu0 0
        %951 = vmatpush2.bf16.msra.mxu0 0
        %952 = vmatprep.subr.bf16.mxu0 0
        %953 = vmatpush2.bf16.msra.mxu0 0
        %954 = vmatprep.subr.bf16.mxu0 0
        %955 = vmatpush2.bf16.msra.mxu0 0
        %956 = vmatprep.subr.bf16.mxu0 0
        %957 = vmatpush2.bf16.msra.mxu0 0
        %958 = vmatprep.mubr.bf16.mxu0 0
        %959 = vmatmul.mubr.bf16.gmra.mxu0 %v841
        %v960 = vpop.f32.mrf.mxu0
        %v961 = vadd.f32 %v877, %v960
        %v962 = vpop.f32.mrf.mxu0
        %v963 = vpop.f32.mrf.mxu0
        %v964 = vadd.f32 %v877, %v963
        %v965 = vpop.f32.mrf.mxu0
        %966 = vmatprep.mubr.bf16.mxu0 0
        %967 = vmatmul.mubr.bf16.gmra.mxu0 %v842
        %v968 = vpop.f32.mrf.mxu0
        %v969 = vadd.f32 %v877, %v968
        %v970 = vpop.f32.mrf.mxu0
        %v971 = vpop.f32.mrf.mxu0
        %v972 = vadd.f32 %v877, %v971
        %v973 = vpop.f32.mrf.mxu0
        %974 = vmatprep.mubr.bf16.mxu0 0
        %975 = vmatmul.mubr.bf16.gmra.mxu0 %v843
        %v976 = vpop.f32.mrf.mxu0
        %v977 = vadd.f32 %v877, %v976
        %v978 = vpop.f32.mrf.mxu0
        %v979 = vpop.f32.mrf.mxu0
        %v980 = vadd.f32 %v877, %v979
        %v981 = vpop.f32.mrf.mxu0
        %982 = vmatprep.mubr.bf16.mxu0 0
        %983 = vmatmul.mubr.bf16.gmra.mxu0 %v844
        %v984 = vpop.f32.mrf.mxu0
        %v985 = vadd.f32 %v877, %v984
        %v986 = vpop.f32.mrf.mxu0
        %v987 = vpop.f32.mrf.mxu0
        %v988 = vadd.f32 %v877, %v987
        %v989 = vpop.f32.mrf.mxu0
        %990 = vmatprep.mubr.bf16.mxu0 0
        %991 = vmatmul.mubr.bf16.gmra.mxu0 %v845
        %v992 = vpop.f32.mrf.mxu0
        %v993 = vadd.f32 %v877, %v992
        %v994 = vpop.f32.mrf.mxu0
        %v995 = vpop.f32.mrf.mxu0
        %v996 = vadd.f32 %v877, %v995
        %v997 = vpop.f32.mrf.mxu0
        %998 = vmatprep.mubr.bf16.mxu0 0
        %999 = vmatmul.mubr.bf16.gmra.mxu0 %v846
        %v1000 = vpop.f32.mrf.mxu0
        %v1001 = vadd.f32 %v877, %v1000
        %v1002 = vpop.f32.mrf.mxu0
        %v1003 = vpop.f32.mrf.mxu0
        %v1004 = vadd.f32 %v877, %v1003
        %v1005 = vpop.f32.mrf.mxu0
        %1006 = vmatprep.mubr.bf16.mxu0 0
        %1007 = vmatmul.mubr.bf16.gmra.mxu0 %v847
        %v1008 = vpop.f32.mrf.mxu0
        %v1009 = vadd.f32 %v877, %v1008
        %v1010 = vpop.f32.mrf.mxu0
        %v1011 = vpop.f32.mrf.mxu0
        %v1012 = vadd.f32 %v877, %v1011
        %v1013 = vpop.f32.mrf.mxu0
        %1014 = vmatprep.mubr.bf16.mxu0 0
        %1015 = vmatmul.mubr.bf16.gmra.mxu0 %v848
        %v1016 = vpop.f32.mrf.mxu0
        %v1017 = vadd.f32 %v877, %v1016
        %v1018 = vpop.f32.mrf.mxu0
        %v1019 = vpop.f32.mrf.mxu0
        %v1020 = vadd.f32 %v877, %v1019
        %v1021 = vpop.f32.mrf.mxu0
        %1022 = vmatprep.mubr.bf16.mxu0 0
        %1023 = vmatmul.mubr.bf16.gmra.mxu0 %v849
        %v1024 = vpop.f32.mrf.mxu0
        %v1025 = vadd.f32 %v877, %v1024
        %v1026 = vpop.f32.mrf.mxu0
        %v1027 = vpop.f32.mrf.mxu0
        %v1028 = vadd.f32 %v877, %v1027
        %v1029 = vpop.f32.mrf.mxu0
        %1030 = vmatprep.mubr.bf16.mxu0 0
        %1031 = vmatmul.mubr.bf16.gmra.mxu0 %v850
        %v1032 = vpop.f32.mrf.mxu0
        %v1033 = vadd.f32 %v877, %v1032
        %v1034 = vpop.f32.mrf.mxu0
        %v1035 = vpop.f32.mrf.mxu0
        %v1036 = vadd.f32 %v877, %v1035
        %v1037 = vpop.f32.mrf.mxu0
        %1038 = vmatprep.mubr.bf16.mxu0 0
        %1039 = vmatmul.mubr.bf16.gmra.mxu0 %v851
        %v1040 = vpop.f32.mrf.mxu0
        %v1041 = vadd.f32 %v877, %v1040
        %v1042 = vpop.f32.mrf.mxu0
        %v1043 = vpop.f32.mrf.mxu0
        %v1044 = vadd.f32 %v877, %v1043
        %v1045 = vpop.f32.mrf.mxu0
        %1046 = vmatprep.mubr.bf16.mxu0 0
        %1047 = vmatmul.mubr.bf16.gmra.mxu0 %v852
        %v1048 = vpop.f32.mrf.mxu0
        %v1049 = vadd.f32 %v877, %v1048
        %v1050 = vpop.f32.mrf.mxu0
        %v1051 = vpop.f32.mrf.mxu0
        %v1052 = vadd.f32 %v877, %v1051
        %v1053 = vpop.f32.mrf.mxu0
        %1054 = vmatprep.mubr.bf16.mxu0 0
        %1055 = vmatmul.mubr.bf16.gmra.mxu0 %v853
        %v1056 = vpop.f32.mrf.mxu0
        %v1057 = vadd.f32 %v877, %v1056
        %v1058 = vpop.f32.mrf.mxu0
        %v1059 = vpop.f32.mrf.mxu0
        %v1060 = vadd.f32 %v877, %v1059
        %v1061 = vpop.f32.mrf.mxu0
        %1062 = vmatprep.mubr.bf16.mxu0 0
        %1063 = vmatmul.mubr.bf16.gmra.mxu0 %v854
        %v1064 = vpop.f32.mrf.mxu0
        %v1065 = vadd.f32 %v877, %v1064
        %v1066 = vpop.f32.mrf.mxu0
        %v1067 = vpop.f32.mrf.mxu0
        %v1068 = vadd.f32 %v877, %v1067
        %v1069 = vpop.f32.mrf.mxu0
        %1070 = vmatprep.mubr.bf16.mxu0 0
        %1071 = vmatmul.mubr.bf16.gmra.mxu0 %v855
        %v1072 = vpop.f32.mrf.mxu0
        %v1073 = vadd.f32 %v877, %v1072
        %v1074 = vpop.f32.mrf.mxu0
        %v1075 = vpop.f32.mrf.mxu0
        %v1076 = vadd.f32 %v877, %v1075
        %v1077 = vpop.f32.mrf.mxu0
        %1078 = vmatprep.mubr.bf16.mxu0 0
        %1079 = vmatmul.mubr.bf16.gmra.mxu0 %v856
        %v1080 = vpop.f32.mrf.mxu0
        %v1081 = vadd.f32 %v877, %v1080
        %v1082 = vpop.f32.mrf.mxu0
        %v1083 = vpop.f32.mrf.mxu0
        %v1084 = vadd.f32 %v877, %v1083
        %v1085 = vpop.f32.mrf.mxu0
        %1086 = vdwg.mxu0
        %1087 = vst [vmem:[%s191] sm:$0xff] %v961
        %1088 = vst [vmem:[%s191 + $0x8] sm:$0xff] %v964
        %1089 = vst [vmem:[%s191 + $0x10] sm:$0xff] %v969
        %1090 = vst [vmem:[%s191 + $0x18] sm:$0xff] %v972
        %1091 = vst [vmem:[%s191 + $0x20] sm:$0xff] %v977
        %1092 = vst [vmem:[%s191 + $0x28] sm:$0xff] %v980
        %1093 = vst [vmem:[%s191 + $0x30] sm:$0xff] %v985
        %1094 = vst [vmem:[%s191 + $0x38] sm:$0xff] %v988
        %1095 = vst [vmem:[%s191 + $0x40] sm:$0xff] %v993
        %1096 = vst [vmem:[%s191 + $0x48] sm:$0xff] %v996
        %1097 = vst [vmem:[%s191 + $0x50] sm:$0xff] %v1001
        %1098 = vst [vmem:[%s191 + $0x58] sm:$0xff] %v1004
        %1099 = vst [vmem:[%s191 + $0x60] sm:$0xff] %v1009
        %1100 = vst [vmem:[%s191 + $0x68] sm:$0xff] %v1012
        %1101 = vst [vmem:[%s191 + $0x70] sm:$0xff] %v1017
        %1102 = vst [vmem:[%s191 + $0x78] sm:$0xff] %v1020
        %1103 = vst [vmem:[%s191 + $0x80] sm:$0xff] %v1025
        %1104 = vst [vmem:[%s191 + $0x88] sm:$0xff] %v1028
        %1105 = vst [vmem:[%s191 + $0x90] sm:$0xff] %v1033
        %1106 = vst [vmem:[%s191 + $0x98] sm:$0xff] %v1036
        %1107 = vst [vmem:[%s191 + $0xa0] sm:$0xff] %v1041
        %1108 = vst [vmem:[%s191 + $0xa8] sm:$0xff] %v1044
        %1109 = vst [vmem:[%s191 + $0xb0] sm:$0xff] %v1049
        %1110 = vst [vmem:[%s191 + $0xb8] sm:$0xff] %v1052
        %1111 = vst [vmem:[%s191 + $0xc0] sm:$0xff] %v1057
        %1112 = vst [vmem:[%s191 + $0xc8] sm:$0xff] %v1060
        %1113 = vst [vmem:[%s191 + $0xd0] sm:$0xff] %v1065
        %1114 = vst [vmem:[%s191 + $0xd8] sm:$0xff] %v1068
        %1115 = vst [vmem:[%s191 + $0xe0] sm:$0xff] %v1073
        %1116 = vst [vmem:[%s191 + $0xe8] sm:$0xff] %v1076
        %1117 = vst [vmem:[%s191 + $0xf0] sm:$0xff] %v1081
        %1118 = vst [vmem:[%s191 + $0xf8] sm:$0xff] %v1084
        %s1119 = sand.u32 %s115, 1
        %s1120 = scalar_lea.sflag [#allocation3], %s1119
        %s1121 = sand.u32 %s115, 1
        %s1122 = smul.addr %s1121, 256
        %s1123 = scalar_lea.vmem [#allocation2], %s1122
        // Predicated region
        $region37: #{tpu_custom_call.1} parent=35 // pred_check
          %p1124 = pneg %p125
        $region38: #{tpu_custom_call.1} parent=35 // pred_check_branch
          %1126 = sbr.rel (%p1124) target = $region40
        $region39: #{tpu_custom_call.1} parent=35 // pred_region
          %s1127 = smul.u32 32, %s18
          %s1129 = ssub.s32 4096, 4096
          %1130 = vsyncadd %s1120, %s1129
          %s1131 = smul.addr %s1127, 128
          %s1132 = scalar_lea.hbm %s4, %s1131
          %s1133 = sshll.u32 %s1123, 4
          %s1134 = int_to_ptr.vmem [resolvable:$true] %s1133
          %1139 = dma.vmem_to_hbm [thread:$0]  %s1134, 4096, %s1132, %s1120, 128, 128, 8
        $region40: #{tpu_custom_call.1} parent=35 // pred_fallthru
          _
      $region36: #{tpu_custom_call.1} parent=5 // pred_fallthru
        _
      %p1140 = scmp.le.s32.totalorder 2, %s13
      // Predicated region
      $region41: #{tpu_custom_call.1} parent=5 // pred_check
        %p1141 = pneg %p1140
      $region42: #{tpu_custom_call.1} parent=5 // pred_check_branch
        %1143 = sbr.rel (%p1141) target = $region44
      $region43: #{tpu_custom_call.1} parent=5 // pred_region
        %s1144 = ssub.s32 %s13, 2
        // Predicated region
        $region45: #{tpu_custom_call.1} parent=43 // pred_check
          %p1145 = pneg %p131
        $region46: #{tpu_custom_call.1} parent=43 // pred_check_branch
          %1147 = sbr.rel (%p1145) target = $region48
        $region47: #{tpu_custom_call.1} parent=43 // pred_region
          %s1148 = sand.u32 %s116, 1
          %s1149 = scalar_lea.sflag [#allocation3], %s1148
          %s1150 = sand.u32 %s116, 1
          %s1151 = smul.addr %s1150, 256
          %s1152 = scalar_lea.vmem [#allocation2], %s1151
          %1153 = dma.done %s1149, 4096
        $region48: #{tpu_custom_call.1} parent=43 // pred_fallthru
          _
      $region44: #{tpu_custom_call.1} parent=5 // pred_fallthru
        _
    $region6: #{tpu_custom_call.1} parent=1 // loop_footer
      %s17 = sadd.s32 1, %s13
    $region7: #{tpu_custom_call.1} parent=1 // loop_footer_branch
      %12 = sbr.rel target = $region3
    $region8: #{tpu_custom_call.1} parent=1 // loop_exit
      _
    %1154 = vsyncpa [#allocation3], 1
    %s1155 = scalar_lea.sflag [#allocation3], 1
    %1156 = vsyncpa %s1155, 1

</llo_original>
